<compile_context>
chip_gen: v7x
topology: tpu7x:2x2x1
jax: 0.10.0
libtpu: 0.0.40
codegen_flags: <defaults>
</compile_context>

<pallas_src>
import jax
import jax.numpy as jnp
from jax.experimental import pallas as pl
from jax.experimental.pallas import tpu as pltpu  # noqa: F401  (TPU backend)


# ---------------------------------------------------------------------------
# Fused conv + bias + ReLU + 2x2-maxpool kernel (one stage = one invocation)
# ---------------------------------------------------------------------------
def conv_relu_pool_kernel(p_ref, w_ref, b_ref, o_ref):
    # p_ref: (K, 4*Mpad)  -- im2col patches for the four 2x2-pool corners,
    #                        concatenated along the lane axis in 128-aligned
    #                        segments of width Mpad (Mpad = padded N*Ho*Wo).
    # w_ref: (Cout, K);  b_ref: (Cout, 1);  o_ref: (Cout, Mpad)
    mpad = o_ref.shape[-1]
    a = jnp.dot(w_ref[...], p_ref[...], preferred_element_type=jnp.float32)
    # max over the four corner segments (static, 128-aligned lane slices)
    m = jnp.maximum(
        jnp.maximum(a[:, 0 * mpad:1 * mpad], a[:, 1 * mpad:2 * mpad]),
        jnp.maximum(a[:, 2 * mpad:3 * mpad], a[:, 3 * mpad:4 * mpad]))
    # relu(max4(W@P) + b) == pool(relu(conv(x) + b)) : ReLU and +b commute with max
    o_ref[...] = jnp.maximum(m + b_ref[...], 0.0).astype(o_ref.dtype)


# ---------------------------------------------------------------------------
# im2col glue: build all four pool-corner patch matrices in one pass
# ---------------------------------------------------------------------------
def _pooled_patches(xc, kh, kw):
    # xc: (Cin, N, H, W) channel-major input.
    # Returns p: (K, 4*Mpad) with K = Cin*kh*kw flattened in (Cin, kh, kw)
    # order (matching w.reshape(Cout, -1)), plus geometry.
    Cin, N, H, W = xc.shape
    OH, OW = H - kh + 1, W - kw + 1          # conv output (even: 28, 10)
    Ho, Wo = OH // 2, OW // 2                # pooled output
    K = Cin * kh * kw
    M = N * Ho * Wo
    Mpad = ((M + 127) // 128) * 128

    # One slice per tap over the full conv-output range, stacked once.
    taps = [xc[:, :, i:i + OH, j:j + OW] for i in range(kh) for j in range(kw)]
    t = jnp.stack(taps, axis=1)              # (Cin, kh*kw, N, OH, OW)

    # Four parity (pool-corner) extractions of the stacked array.
    cols = []
    for di in (0, 1):
        for dj in (0, 1):
            c = t[:, :, :, di::2, dj::2].reshape(K, M)
            cols.append(jnp.pad(c, ((0, 0), (0, Mpad - M))))
    p = jnp.concatenate(cols, axis=1)        # (K, 4*Mpad)
    return p, Ho, Wo, M, Mpad


# ---------------------------------------------------------------------------
# Wrapper: one fused stage (conv -> bias -> relu -> 2x2 maxpool), channel-major
# ---------------------------------------------------------------------------
def conv_relu_pool(xc, w, b):
    # xc: (Cin, N, H, W) channel-major; w: (Cout, Cin, kh, kw); b: (Cout,)
    # returns channel-major (Cout, N, Ho, Wo) = pool(relu(conv(x) + b))
    Cin, N, H, W = xc.shape
    Cout, _, kh, kw = w.shape
    K = Cin * kh * kw

    p, Ho, Wo, M, Mpad = _pooled_patches(xc, kh, kw)
    wmat = w.reshape(Cout, K).astype(jnp.float32)
    bmat = b.reshape(Cout, 1).astype(jnp.float32)

    cost = pl.CostEstimate(
        flops=2 * Cout * K * 4 * Mpad,
        transcendentals=0,
        bytes_accessed=4 * (K * 4 * Mpad + Cout * K + Cout + Cout * Mpad))

    out = pl.pallas_call(
        conv_relu_pool_kernel,
        out_shape=jax.ShapeDtypeStruct((Cout, Mpad), jnp.float32),
        in_specs=[
            pl.BlockSpec((K, 4 * Mpad), lambda: (0, 0)),
            pl.BlockSpec((Cout, K), lambda: (0, 0)),
            pl.BlockSpec((Cout, 1), lambda: (0, 0)),
        ],
        out_specs=pl.BlockSpec((Cout, Mpad), lambda: (0, 0)),
        cost_estimate=cost,
    )(p, wmat, bmat)

    # (Cout, Mpad) -> valid lanes -> channel-major (Cout, N, Ho, Wo)
    return out[:, :M].reshape(Cout, N, Ho, Wo)


@jax.jit
def relu_module_forward(x, params):
    # Matches Relu.forward: pool(relu(conv1(x))); pool(relu(conv2(x)))
    xc = jnp.transpose(x, (1, 0, 2, 3))                     # (1, N, 32, 32)
    xc = conv_relu_pool(xc, params["w1"], params["b1"])     # (10, N, 14, 14)
    xc = conv_relu_pool(xc, params["w2"], params["b2"])     # (20, N, 5, 5)
    return jnp.transpose(xc, (1, 0, 2, 3))                  # (N, 20, 5, 5)


# ---------------------------------------------------------------------------
# Deterministic parameter init (PyTorch-style uniform(-1/sqrt(fan_in), +))
# ---------------------------------------------------------------------------
def init_params(key):
    k1, k2, k3, k4 = jax.random.split(key, 4)

    def u(k, shape, fan_in):
        bound = 1.0 / jnp.sqrt(fan_in)
        return jax.random.uniform(k, shape, jnp.float32, -bound, bound)

    return {
        "w1": u(k1, (10, 1, 5, 5), 1 * 5 * 5),
        "b1": u(k2, (10,), 1 * 5 * 5),
        "w2": u(k3, (20, 10, 5, 5), 10 * 5 * 5),
        "b2": u(k4, (20,), 10 * 5 * 5),
    }


# ---------------------------------------------------------------------------
# Pure-JAX reference for validation
# ---------------------------------------------------------------------------
def _ref_forward(x, params):
    def conv(x, w, b):
        y = jax.lax.conv_general_dilated(
            x, w, window_strides=(1, 1), padding="VALID",
            dimension_numbers=("NCHW", "OIHW", "NCHW"))
        return jnp.maximum(y + b[None, :, None, None], 0.0)

    def pool(x):
        return jax.lax.reduce_window(
            x, -jnp.inf, jax.lax.max,
            window_dimensions=(1, 1, 2, 2), window_strides=(1, 1, 2, 2),
            padding="VALID")

    x = pool(conv(x, params["w1"], params["b1"]))
    x = pool(conv(x, params["w2"], params["b2"]))
    return x


if __name__ == "__main__":
    key = jax.random.PRNGKey(0)
    kp, kx = jax.random.split(key)
    params = init_params(kp)

    # Input implied by the module: NCHW, 1 channel, 32x32 spatial. batch=2.
    x = jax.random.normal(kx, (2, 1, 32, 32), dtype=jnp.float32)

    out = jax.block_until_ready(relu_module_forward(x, params))
    assert out.shape == (2, 20, 5, 5), out.shape

    ref = jax.block_until_ready(_ref_forward(x, params))
    assert jnp.allclose(out, ref, atol=1e-3, rtol=1e-3), "mismatch vs reference"

    print("KERNEL_OK")
</pallas_src>

<mosaic_0001>
module attributes {stable_mosaic.version = 11 : i64} {
  func.func @conv_relu_pool_kernel(%arg0: memref<25x2048xf32, #tpu.memory_space<vmem>>, %arg1: memref<10x25xf32, #tpu.memory_space<vmem>>, %arg2: memref<10x1xf32, #tpu.memory_space<vmem>>, %arg3: memref<10x512xf32, #tpu.memory_space<vmem>>) attributes {dimension_semantics = [], scalar_prefetch = 0 : i64, scratch_operands = 0 : i64, tpu.core_type = #tpu.core_type<tc>} {
    %c0 = arith.constant 0 : index
    %c0_0 = arith.constant 0 : index
    %0 = vector.load %arg1[%c0, %c0_0] : memref<10x25xf32, #tpu.memory_space<vmem>>, vector<10x25xf32>
    %c0_1 = arith.constant 0 : index
    %c0_2 = arith.constant 0 : index
    %1 = vector.load %arg0[%c0_1, %c0_2] : memref<25x2048xf32, #tpu.memory_space<vmem>>, vector<25x2048xf32>
    %cst = arith.constant dense<0.000000e+00> : vector<10x2048xf32>
    %2 = tpu.matmul %0, %1, %cst {dimension_numbers = #tpu.dot_dimension_numbers<[1], [0], [0], [1], [0, 0, 1, 1], [], []>} : vector<10x25xf32>, vector<25x2048xf32>, vector<10x2048xf32> -> vector<10x2048xf32>
    %3 = vector.extract_strided_slice %2 {offsets = [0, 0], sizes = [10, 512], strides = [1, 1]} : vector<10x2048xf32> to vector<10x512xf32>
    %4 = vector.extract_strided_slice %2 {offsets = [0, 512], sizes = [10, 512], strides = [1, 1]} : vector<10x2048xf32> to vector<10x512xf32>
    %5 = arith.maximumf %3, %4 : vector<10x512xf32>
    %6 = vector.extract_strided_slice %2 {offsets = [0, 1024], sizes = [10, 512], strides = [1, 1]} : vector<10x2048xf32> to vector<10x512xf32>
    %7 = vector.extract_strided_slice %2 {offsets = [0, 1536], sizes = [10, 512], strides = [1, 1]} : vector<10x2048xf32> to vector<10x512xf32>
    %8 = arith.maximumf %6, %7 : vector<10x512xf32>
    %9 = arith.maximumf %5, %8 : vector<10x512xf32>
    %c0_3 = arith.constant 0 : index
    %c0_4 = arith.constant 0 : index
    %10 = vector.load %arg2[%c0_3, %c0_4] : memref<10x1xf32, #tpu.memory_space<vmem>>, vector<10x1xf32>
    %11 = vector.broadcast %10 : vector<10x1xf32> to vector<10x512xf32>
    %12 = arith.addf %9, %11 : vector<10x512xf32>
    %cst_5 = arith.constant 0.000000e+00 : f32
    %13 = vector.broadcast %cst_5 : f32 to vector<10x512xf32>
    %14 = arith.maximumf %12, %13 : vector<10x512xf32>
    %c0_6 = arith.constant 0 : index
    %c0_7 = arith.constant 0 : index
    %15 = vector.load %arg3[%c0_6, %c0_7] : memref<10x512xf32, #tpu.memory_space<vmem>>, vector<10x512xf32>
    tpu.vector_store %arg3[%c0_6, %c0_7], %14 {strides = array<i32>} : memref<10x512xf32, #tpu.memory_space<vmem>>, vector<10x512xf32>,
    return
  }
}

module attributes {stable_mosaic.version = 11 : i64} {
  func.func @conv_relu_pool_kernel(%arg0: memref<250x512xf32, #tpu.memory_space<vmem>>, %arg1: memref<20x250xf32, #tpu.memory_space<vmem>>, %arg2: memref<20x1xf32, #tpu.memory_space<vmem>>, %arg3: memref<20x128xf32, #tpu.memory_space<vmem>>) attributes {dimension_semantics = [], scalar_prefetch = 0 : i64, scratch_operands = 0 : i64, tpu.core_type = #tpu.core_type<tc>} {
    %c0 = arith.constant 0 : index
    %c0_0 = arith.constant 0 : index
    %0 = vector.load %arg1[%c0, %c0_0] : memref<20x250xf32, #tpu.memory_space<vmem>>, vector<20x250xf32>
    %c0_1 = arith.constant 0 : index
    %c0_2 = arith.constant 0 : index
    %1 = vector.load %arg0[%c0_1, %c0_2] : memref<250x512xf32, #tpu.memory_space<vmem>>, vector<250x512xf32>
    %cst = arith.constant dense<0.000000e+00> : vector<20x512xf32>
    %2 = tpu.matmul %0, %1, %cst {dimension_numbers = #tpu.dot_dimension_numbers<[1], [0], [0], [1], [0, 0, 1, 1], [], []>} : vector<20x250xf32>, vector<250x512xf32>, vector<20x512xf32> -> vector<20x512xf32>
    %3 = vector.extract_strided_slice %2 {offsets = [0, 0], sizes = [20, 128], strides = [1, 1]} : vector<20x512xf32> to vector<20x128xf32>
    %4 = vector.extract_strided_slice %2 {offsets = [0, 128], sizes = [20, 128], strides = [1, 1]} : vector<20x512xf32> to vector<20x128xf32>
    %5 = arith.maximumf %3, %4 : vector<20x128xf32>
    %6 = vector.extract_strided_slice %2 {offsets = [0, 256], sizes = [20, 128], strides = [1, 1]} : vector<20x512xf32> to vector<20x128xf32>
    %7 = vector.extract_strided_slice %2 {offsets = [0, 384], sizes = [20, 128], strides = [1, 1]} : vector<20x512xf32> to vector<20x128xf32>
    %8 = arith.maximumf %6, %7 : vector<20x128xf32>
    %9 = arith.maximumf %5, %8 : vector<20x128xf32>
    %c0_3 = arith.constant 0 : index
    %c0_4 = arith.constant 0 : index
    %10 = vector.load %arg2[%c0_3, %c0_4] : memref<20x1xf32, #tpu.memory_space<vmem>>, vector<20x1xf32>
    %11 = vector.broadcast %10 : vector<20x1xf32> to vector<20x128xf32>
    %12 = arith.addf %9, %11 : vector<20x128xf32>
    %cst_5 = arith.constant 0.000000e+00 : f32
    %13 = vector.broadcast %cst_5 : f32 to vector<20x128xf32>
    %14 = arith.maximumf %12, %13 : vector<20x128xf32>
    %c0_6 = arith.constant 0 : index
    %c0_7 = arith.constant 0 : index
    %15 = vector.load %arg3[%c0_6, %c0_7] : memref<20x128xf32, #tpu.memory_space<vmem>>, vector<20x128xf32>
    tpu.vector_store %arg3[%c0_6, %c0_7], %14 {strides = array<i32>} : memref<20x128xf32, #tpu.memory_space<vmem>>, vector<20x128xf32>,
    return
  }
}

</mosaic_0001>

<llo_original>
// kernel: relu_module_forward.2
$region0: #{relu_module_forward.2}
  #allocation0 [shape = 'u32[]', space=smem, size = 0x4, offset = 0x4, fixed_abs, tag = 'smem constant byte address 0x4 - core index']
  #allocation1 [shape = 'u32[144,128]{1,0:T(1,128)}', space=vmem, size = 0x12000, scoped, tag = 'internal scratch']
  %s0 = inlined_call_operand.vmem [shape: f32[25,2048], index: 0, kind: input, shape index: {}]
  %s1 = inlined_call_operand.vmem [shape: f32[10,25], index: 1, kind: input, shape index: {}]
  %s2 = inlined_call_operand.vmem [shape: f32[10,1], index: 2, kind: input, shape index: {}]
  %s3 = inlined_call_operand.vmem [shape: f32[10,512], index: 3, kind: output, shape index: {}]
  %s4 = sld [smem:[#allocation0]]
  $region22: #{relu_module_forward.2} parent=0
    _
  %s6 = ssub.s32 1, %s4
  %s7 = scalar_select 0, %s6, %s4
  // Predicated region
  $region2: #{relu_module_forward.2} parent=0 // pred_check
    _
  $region3: #{relu_module_forward.2} parent=0 // pred_check_branch
    %9 = sbr.rel (0) target = $region5
  $region4: #{relu_module_forward.2} parent=0 // pred_region
    _
  $region5: #{relu_module_forward.2} parent=0 // pred_fallthru
    _
  // Predicated region
  $region6: #{relu_module_forward.2} parent=0 // pred_check
    _
  $region7: #{relu_module_forward.2} parent=0 // pred_check_branch
    %11 = sbr.rel (0) target = $region9
  $region8: #{relu_module_forward.2} parent=0 // pred_region
    _
  $region9: #{relu_module_forward.2} parent=0 // pred_fallthru
    _
  // Predicated region
  $region10: #{relu_module_forward.2} parent=0 // pred_check
    _
  $region11: #{relu_module_forward.2} parent=0 // pred_check_branch
    %13 = sbr.rel (0) target = $region13
  $region12: #{relu_module_forward.2} parent=0 // pred_region
    _
  $region13: #{relu_module_forward.2} parent=0 // pred_fallthru
    _
  %v14 = vld [vmem:[%s1] sm:$0xff]
  %v15 = vld [vmem:[%s1 + $0x8] sm:$0x3]
  %v16 = vld [vmem:[%s0] sm:$0xff]
  %v17 = vld [vmem:[%s0 + $0x8] sm:$0xff]
  %v18 = vld [vmem:[%s0 + $0x10] sm:$0xff]
  %v19 = vld [vmem:[%s0 + $0x18] sm:$0xff]
  %v20 = vld [vmem:[%s0 + $0x20] sm:$0xff]
  %v21 = vld [vmem:[%s0 + $0x28] sm:$0xff]
  %v22 = vld [vmem:[%s0 + $0x30] sm:$0xff]
  %v23 = vld [vmem:[%s0 + $0x38] sm:$0xff]
  %v24 = vld [vmem:[%s0 + $0x40] sm:$0xff]
  %v25 = vld [vmem:[%s0 + $0x48] sm:$0xff]
  %v26 = vld [vmem:[%s0 + $0x50] sm:$0xff]
  %v27 = vld [vmem:[%s0 + $0x58] sm:$0xff]
  %v28 = vld [vmem:[%s0 + $0x60] sm:$0xff]
  %v29 = vld [vmem:[%s0 + $0x68] sm:$0xff]
  %v30 = vld [vmem:[%s0 + $0x70] sm:$0xff]
  %v31 = vld [vmem:[%s0 + $0x78] sm:$0xff]
  %v32 = vld [vmem:[%s0 + $0x80] sm:$0xff]
  %v33 = vld [vmem:[%s0 + $0x88] sm:$0xff]
  %v34 = vld [vmem:[%s0 + $0x90] sm:$0xff]
  %v35 = vld [vmem:[%s0 + $0x98] sm:$0xff]
  %v36 = vld [vmem:[%s0 + $0xa0] sm:$0xff]
  %v37 = vld [vmem:[%s0 + $0xa8] sm:$0xff]
  %v38 = vld [vmem:[%s0 + $0xb0] sm:$0xff]
  %v39 = vld [vmem:[%s0 + $0xb8] sm:$0xff]
  %v40 = vld [vmem:[%s0 + $0xc0] sm:$0xff]
  %v41 = vld [vmem:[%s0 + $0xc8] sm:$0xff]
  %v42 = vld [vmem:[%s0 + $0xd0] sm:$0xff]
  %v43 = vld [vmem:[%s0 + $0xd8] sm:$0xff]
  %v44 = vld [vmem:[%s0 + $0xe0] sm:$0xff]
  %v45 = vld [vmem:[%s0 + $0xe8] sm:$0xff]
  %v46 = vld [vmem:[%s0 + $0xf0] sm:$0xff]
  %v47 = vld [vmem:[%s0 + $0xf8] sm:$0xff]
  %v48 = vld [vmem:[%s0 + $0x100] sm:$0xff]
  %v49 = vld [vmem:[%s0 + $0x108] sm:$0xff]
  %v50 = vld [vmem:[%s0 + $0x110] sm:$0xff]
  %v51 = vld [vmem:[%s0 + $0x118] sm:$0xff]
  %v52 = vld [vmem:[%s0 + $0x120] sm:$0xff]
  %v53 = vld [vmem:[%s0 + $0x128] sm:$0xff]
  %v54 = vld [vmem:[%s0 + $0x130] sm:$0xff]
  %v55 = vld [vmem:[%s0 + $0x138] sm:$0xff]
  %v56 = vld [vmem:[%s0 + $0x140] sm:$0xff]
  %v57 = vld [vmem:[%s0 + $0x148] sm:$0xff]
  %v58 = vld [vmem:[%s0 + $0x150] sm:$0xff]
  %v59 = vld [vmem:[%s0 + $0x158] sm:$0xff]
  %v60 = vld [vmem:[%s0 + $0x160] sm:$0xff]
  %v61 = vld [vmem:[%s0 + $0x168] sm:$0xff]
  %v62 = vld [vmem:[%s0 + $0x170] sm:$0xff]
  %v63 = vld [vmem:[%s0 + $0x178] sm:$0xff]
  %v64 = vld [vmem:[%s0 + $0x180] sm:$0x1]
  %v65 = vld [vmem:[%s0 + $0x188] sm:$0x1]
  %v66 = vld [vmem:[%s0 + $0x190] sm:$0x1]
  %v67 = vld [vmem:[%s0 + $0x198] sm:$0x1]
  %v68 = vld [vmem:[%s0 + $0x1a0] sm:$0x1]
  %v69 = vld [vmem:[%s0 + $0x1a8] sm:$0x1]
  %v70 = vld [vmem:[%s0 + $0x1b0] sm:$0x1]
  %v71 = vld [vmem:[%s0 + $0x1b8] sm:$0x1]
  %v72 = vld [vmem:[%s0 + $0x1c0] sm:$0x1]
  %v73 = vld [vmem:[%s0 + $0x1c8] sm:$0x1]
  %v74 = vld [vmem:[%s0 + $0x1d0] sm:$0x1]
  %v75 = vld [vmem:[%s0 + $0x1d8] sm:$0x1]
  %v76 = vld [vmem:[%s0 + $0x1e0] sm:$0x1]
  %v77 = vld [vmem:[%s0 + $0x1e8] sm:$0x1]
  %v78 = vld [vmem:[%s0 + $0x1f0] sm:$0x1]
  %v79 = vld [vmem:[%s0 + $0x1f8] sm:$0x1]
  %vm80 = vcmask 203776
  %v82 = vsel %vm80, %v14, 0
  %v85 = vsel %vm80, %v15, 0
  %vm87 = vcmask 1040384
  %v89 = vsel %vm87, %v64, 0
  %v92 = vsel %vm87, %v65, 0
  %v95 = vsel %vm87, %v66, 0
  %v98 = vsel %vm87, %v67, 0
  %v101 = vsel %vm87, %v68, 0
  %v104 = vsel %vm87, %v69, 0
  %v107 = vsel %vm87, %v70, 0
  %v110 = vsel %vm87, %v71, 0
  %v113 = vsel %vm87, %v72, 0
  %v116 = vsel %vm87, %v73, 0
  %v119 = vsel %vm87, %v74, 0
  %v122 = vsel %vm87, %v75, 0
  %v125 = vsel %vm87, %v76, 0
  %v128 = vsel %vm87, %v77, 0
  %v131 = vsel %vm87, %v78, 0
  %v134 = vsel %vm87, %v79, 0
  %136 = vmatprep.subr.mxu0 %v17
  %137 = vmatpush1.msra.mxu0 %v16
  %138 = vmatprep.subr.mxu0 %v33
  %139 = vmatpush1.msra.mxu0 %v32
  %140 = vmatprep.subr.mxu0 %v49
  %141 = vmatpush1.msra.mxu0 %v48
  %142 = vmatprep.subr.mxu0 %v92
  %143 = vmatpush1.msra.mxu0 %v89
  %144 = vmatprep.subr.mxu0 0.0
  %145 = vmatpush1.msra.mxu0 0.0
  %146 = vmatprep.subr.mxu0 0.0
  %147 = vmatpush1.msra.mxu0 0.0
  %148 = vmatprep.subr.mxu0 0.0
  %149 = vmatpush1.msra.mxu0 0.0
  %150 = vmatprep.subr.mxu0 0.0
  %151 = vmatpush1.msra.mxu0 0.0
  %152 = vmatprep.subr.mxu0 0.0
  %153 = vmatpush1.msra.mxu0 0.0
  %154 = vmatprep.subr.mxu0 0.0
  %155 = vmatpush1.msra.mxu0 0.0
  %156 = vmatprep.subr.mxu0 0.0
  %157 = vmatpush1.msra.mxu0 0.0
  %158 = vmatprep.subr.mxu0 0.0
  %159 = vmatpush1.msra.mxu0 0.0
  %160 = vmatprep.subr.mxu0 0.0
  %161 = vmatpush1.msra.mxu0 0.0
  %162 = vmatprep.subr.mxu0 0.0
  %163 = vmatpush1.msra.mxu0 0.0
  %164 = vmatprep.subr.mxu0 0.0
  %165 = vmatpush1.msra.mxu0 0.0
  %166 = vmatprep.subr.mxu0 0.0
  %167 = vmatpush1.msra.mxu0 0.0
  %168 = vmatprep.subr.mxu0 0.0
  %169 = vmatpush1.msra.mxu0 0.0
  %170 = vmatprep.subr.mxu0 0.0
  %171 = vmatpush1.msra.mxu0 0.0
  %172 = vmatprep.subr.mxu0 0.0
  %173 = vmatpush1.msra.mxu0 0.0
  %174 = vmatprep.subr.mxu0 0.0
  %175 = vmatpush1.msra.mxu0 0.0
  %176 = vmatprep.subr.mxu0 0.0
  %177 = vmatpush1.msra.mxu0 0.0
  %178 = vmatprep.subr.mxu0 0.0
  %179 = vmatpush1.msra.mxu0 0.0
  %180 = vmatprep.subr.mxu0 0.0
  %181 = vmatpush1.msra.mxu0 0.0
  %182 = vmatprep.subr.mxu0 0.0
  %183 = vmatpush1.msra.mxu0 0.0
  %184 = vmatprep.subr.mxu0 0.0
  %185 = vmatpush1.msra.mxu0 0.0
  %186 = vmatprep.subr.mxu0 0.0
  %187 = vmatpush1.msra.mxu0 0.0
  %188 = vmatprep.subr.mxu0 0.0
  %189 = vmatpush1.msra.mxu0 0.0
  %190 = vmatprep.subr.mxu0 0.0
  %191 = vmatpush1.msra.mxu0 0.0
  %192 = vmatprep.subr.mxu0 0.0
  %193 = vmatpush1.msra.mxu0 0.0
  %194 = vmatprep.subr.mxu0 0.0
  %195 = vmatpush1.msra.mxu0 0.0
  %196 = vmatprep.subr.mxu0 0.0
  %197 = vmatpush1.msra.mxu0 0.0
  %198 = vmatprep.subr.mxu0 0.0
  %199 = vmatpush1.msra.mxu0 0.0
  %200 = vmatprep.mubr.f32.mxu0 0.0
  %201 = vmatmul.mubr.f32.gmra.mrb[0].mxu0 %v82
  %v202 = vpop.f32.mrb[0].mxu0
  %v203 = vadd.f32 0.0, %v202
  %v204 = vpop.f32.mrb[0].mxu0
  %v205 = vadd.f32 0.0, %v204
  %206 = vmatprep.mubr.f32.mxu0 0.0
  %207 = vmatmul.mubr.f32.gmra.mrb[0].mxu0 %v85
  %v208 = vpop.f32.mrb[0].mxu0
  %v209 = vadd.f32 0.0, %v208
  %v210 = vpop.f32.mrb[0].mxu0
  %v211 = vadd.f32 0.0, %v210
  %212 = vdwg.mxu0
  %213 = vmatprep.subr.mxu0 %v19
  %214 = vmatpush1.msra.mxu0 %v18
  %215 = vmatprep.subr.mxu0 %v35
  %216 = vmatpush1.msra.mxu0 %v34
  %217 = vmatprep.subr.mxu0 %v51
  %218 = vmatpush1.msra.mxu0 %v50
  %219 = vmatprep.subr.mxu0 %v98
  %220 = vmatpush1.msra.mxu0 %v95
  %221 = vmatprep.subr.mxu0 0.0
  %222 = vmatpush1.msra.mxu0 0.0
  %223 = vmatprep.subr.mxu0 0.0
  %224 = vmatpush1.msra.mxu0 0.0
  %225 = vmatprep.subr.mxu0 0.0
  %226 = vmatpush1.msra.mxu0 0.0
  %227 = vmatprep.subr.mxu0 0.0
  %228 = vmatpush1.msra.mxu0 0.0
  %229 = vmatprep.subr.mxu0 0.0
  %230 = vmatpush1.msra.mxu0 0.0
  %231 = vmatprep.subr.mxu0 0.0
  %232 = vmatpush1.msra.mxu0 0.0
  %233 = vmatprep.subr.mxu0 0.0
  %234 = vmatpush1.msra.mxu0 0.0
  %235 = vmatprep.subr.mxu0 0.0
  %236 = vmatpush1.msra.mxu0 0.0
  %237 = vmatprep.subr.mxu0 0.0
  %238 = vmatpush1.msra.mxu0 0.0
  %239 = vmatprep.subr.mxu0 0.0
  %240 = vmatpush1.msra.mxu0 0.0
  %241 = vmatprep.subr.mxu0 0.0
  %242 = vmatpush1.msra.mxu0 0.0
  %243 = vmatprep.subr.mxu0 0.0
  %244 = vmatpush1.msra.mxu0 0.0
  %245 = vmatprep.subr.mxu0 0.0
  %246 = vmatpush1.msra.mxu0 0.0
  %247 = vmatprep.subr.mxu0 0.0
  %248 = vmatpush1.msra.mxu0 0.0
  %249 = vmatprep.subr.mxu0 0.0
  %250 = vmatpush1.msra.mxu0 0.0
  %251 = vmatprep.subr.mxu0 0.0
  %252 = vmatpush1.msra.mxu0 0.0
  %253 = vmatprep.subr.mxu0 0.0
  %254 = vmatpush1.msra.mxu0 0.0
  %255 = vmatprep.subr.mxu0 0.0
  %256 = vmatpush1.msra.mxu0 0.0
  %257 = vmatprep.subr.mxu0 0.0
  %258 = vmatpush1.msra.mxu0 0.0
  %259 = vmatprep.subr.mxu0 0.0
  %260 = vmatpush1.msra.mxu0 0.0
  %261 = vmatprep.subr.mxu0 0.0
  %262 = vmatpush1.msra.mxu0 0.0
  %263 = vmatprep.subr.mxu0 0.0
  %264 = vmatpush1.msra.mxu0 0.0
  %265 = vmatprep.subr.mxu0 0.0
  %266 = vmatpush1.msra.mxu0 0.0
  %267 = vmatprep.subr.mxu0 0.0
  %268 = vmatpush1.msra.mxu0 0.0
  %269 = vmatprep.subr.mxu0 0.0
  %270 = vmatpush1.msra.mxu0 0.0
  %271 = vmatprep.subr.mxu0 0.0
  %272 = vmatpush1.msra.mxu0 0.0
  %273 = vmatprep.subr.mxu0 0.0
  %274 = vmatpush1.msra.mxu0 0.0
  %275 = vmatprep.subr.mxu0 0.0
  %276 = vmatpush1.msra.mxu0 0.0
  %277 = vmatprep.mubr.f32.mxu0 0.0
  %278 = vmatmul.mubr.f32.gmra.mrb[0].mxu0 %v82
  %v279 = vpop.f32.mrb[0].mxu0
  %v280 = vadd.f32 0.0, %v279
  %v281 = vpop.f32.mrb[0].mxu0
  %v282 = vadd.f32 0.0, %v281
  %283 = vmatprep.mubr.f32.mxu0 0.0
  %284 = vmatmul.mubr.f32.gmra.mrb[0].mxu0 %v85
  %v285 = vpop.f32.mrb[0].mxu0
  %v286 = vadd.f32 0.0, %v285
  %v287 = vpop.f32.mrb[0].mxu0
  %v288 = vadd.f32 0.0, %v287
  %289 = vdwg.mxu0
  %290 = vmatprep.subr.mxu0 %v21
  %291 = vmatpush1.msra.mxu0 %v20
  %292 = vmatprep.subr.mxu0 %v37
  %293 = vmatpush1.msra.mxu0 %v36
  %294 = vmatprep.subr.mxu0 %v53
  %295 = vmatpush1.msra.mxu0 %v52
  %296 = vmatprep.subr.mxu0 %v104
  %297 = vmatpush1.msra.mxu0 %v101
  %298 = vmatprep.subr.mxu0 0.0
  %299 = vmatpush1.msra.mxu0 0.0
  %300 = vmatprep.subr.mxu0 0.0
  %301 = vmatpush1.msra.mxu0 0.0
  %302 = vmatprep.subr.mxu0 0.0
  %303 = vmatpush1.msra.mxu0 0.0
  %304 = vmatprep.subr.mxu0 0.0
  %305 = vmatpush1.msra.mxu0 0.0
  %306 = vmatprep.subr.mxu0 0.0
  %307 = vmatpush1.msra.mxu0 0.0
  %308 = vmatprep.subr.mxu0 0.0
  %309 = vmatpush1.msra.mxu0 0.0
  %310 = vmatprep.subr.mxu0 0.0
  %311 = vmatpush1.msra.mxu0 0.0
  %312 = vmatprep.subr.mxu0 0.0
  %313 = vmatpush1.msra.mxu0 0.0
  %314 = vmatprep.subr.mxu0 0.0
  %315 = vmatpush1.msra.mxu0 0.0
  %316 = vmatprep.subr.mxu0 0.0
  %317 = vmatpush1.msra.mxu0 0.0
  %318 = vmatprep.subr.mxu0 0.0
  %319 = vmatpush1.msra.mxu0 0.0
  %320 = vmatprep.subr.mxu0 0.0
  %321 = vmatpush1.msra.mxu0 0.0
  %322 = vmatprep.subr.mxu0 0.0
  %323 = vmatpush1.msra.mxu0 0.0
  %324 = vmatprep.subr.mxu0 0.0
  %325 = vmatpush1.msra.mxu0 0.0
  %326 = vmatprep.subr.mxu0 0.0
  %327 = vmatpush1.msra.mxu0 0.0
  %328 = vmatprep.subr.mxu0 0.0
  %329 = vmatpush1.msra.mxu0 0.0
  %330 = vmatprep.subr.mxu0 0.0
  %331 = vmatpush1.msra.mxu0 0.0
  %332 = vmatprep.subr.mxu0 0.0
  %333 = vmatpush1.msra.mxu0 0.0
  %334 = vmatprep.subr.mxu0 0.0
  %335 = vmatpush1.msra.mxu0 0.0
  %336 = vmatprep.subr.mxu0 0.0
  %337 = vmatpush1.msra.mxu0 0.0
  %338 = vmatprep.subr.mxu0 0.0
  %339 = vmatpush1.msra.mxu0 0.0
  %340 = vmatprep.subr.mxu0 0.0
  %341 = vmatpush1.msra.mxu0 0.0
  %342 = vmatprep.subr.mxu0 0.0
  %343 = vmatpush1.msra.mxu0 0.0
  %344 = vmatprep.subr.mxu0 0.0
  %345 = vmatpush1.msra.mxu0 0.0
  %346 = vmatprep.subr.mxu0 0.0
  %347 = vmatpush1.msra.mxu0 0.0
  %348 = vmatprep.subr.mxu0 0.0
  %349 = vmatpush1.msra.mxu0 0.0
  %350 = vmatprep.subr.mxu0 0.0
  %351 = vmatpush1.msra.mxu0 0.0
  %352 = vmatprep.subr.mxu0 0.0
  %353 = vmatpush1.msra.mxu0 0.0
  %354 = vmatprep.mubr.f32.mxu0 0.0
  %355 = vmatmul.mubr.f32.gmra.mrb[0].mxu0 %v82
  %v356 = vpop.f32.mrb[0].mxu0
  %v357 = vadd.f32 0.0, %v356
  %v358 = vpop.f32.mrb[0].mxu0
  %v359 = vadd.f32 0.0, %v358
  %360 = vmatprep.mubr.f32.mxu0 0.0
  %361 = vmatmul.mubr.f32.gmra.mrb[0].mxu0 %v85
  %v362 = vpop.f32.mrb[0].mxu0
  %v363 = vadd.f32 0.0, %v362
  %v364 = vpop.f32.mrb[0].mxu0
  %v365 = vadd.f32 0.0, %v364
  %366 = vdwg.mxu0
  %367 = vmatprep.subr.mxu0 %v23
  %368 = vmatpush1.msra.mxu0 %v22
  %369 = vmatprep.subr.mxu0 %v39
  %370 = vmatpush1.msra.mxu0 %v38
  %371 = vmatprep.subr.mxu0 %v55
  %372 = vmatpush1.msra.mxu0 %v54
  %373 = vmatprep.subr.mxu0 %v110
  %374 = vmatpush1.msra.mxu0 %v107
  %375 = vmatprep.subr.mxu0 0.0
  %376 = vmatpush1.msra.mxu0 0.0
  %377 = vmatprep.subr.mxu0 0.0
  %378 = vmatpush1.msra.mxu0 0.0
  %379 = vmatprep.subr.mxu0 0.0
  %380 = vmatpush1.msra.mxu0 0.0
  %381 = vmatprep.subr.mxu0 0.0
  %382 = vmatpush1.msra.mxu0 0.0
  %383 = vmatprep.subr.mxu0 0.0
  %384 = vmatpush1.msra.mxu0 0.0
  %385 = vmatprep.subr.mxu0 0.0
  %386 = vmatpush1.msra.mxu0 0.0
  %387 = vmatprep.subr.mxu0 0.0
  %388 = vmatpush1.msra.mxu0 0.0
  %389 = vmatprep.subr.mxu0 0.0
  %390 = vmatpush1.msra.mxu0 0.0
  %391 = vmatprep.subr.mxu0 0.0
  %392 = vmatpush1.msra.mxu0 0.0
  %393 = vmatprep.subr.mxu0 0.0
  %394 = vmatpush1.msra.mxu0 0.0
  %395 = vmatprep.subr.mxu0 0.0
  %396 = vmatpush1.msra.mxu0 0.0
  %397 = vmatprep.subr.mxu0 0.0
  %398 = vmatpush1.msra.mxu0 0.0
  %399 = vmatprep.subr.mxu0 0.0
  %400 = vmatpush1.msra.mxu0 0.0
  %401 = vmatprep.subr.mxu0 0.0
  %402 = vmatpush1.msra.mxu0 0.0
  %403 = vmatprep.subr.mxu0 0.0
  %404 = vmatpush1.msra.mxu0 0.0
  %405 = vmatprep.subr.mxu0 0.0
  %406 = vmatpush1.msra.mxu0 0.0
  %407 = vmatprep.subr.mxu0 0.0
  %408 = vmatpush1.msra.mxu0 0.0
  %409 = vmatprep.subr.mxu0 0.0
  %410 = vmatpush1.msra.mxu0 0.0
  %411 = vmatprep.subr.mxu0 0.0
  %412 = vmatpush1.msra.mxu0 0.0
  %413 = vmatprep.subr.mxu0 0.0
  %414 = vmatpush1.msra.mxu0 0.0
  %415 = vmatprep.subr.mxu0 0.0
  %416 = vmatpush1.msra.mxu0 0.0
  %417 = vmatprep.subr.mxu0 0.0
  %418 = vmatpush1.msra.mxu0 0.0
  %419 = vmatprep.subr.mxu0 0.0
  %420 = vmatpush1.msra.mxu0 0.0
  %421 = vmatprep.subr.mxu0 0.0
  %422 = vmatpush1.msra.mxu0 0.0
  %423 = vmatprep.subr.mxu0 0.0
  %424 = vmatpush1.msra.mxu0 0.0
  %425 = vmatprep.subr.mxu0 0.0
  %426 = vmatpush1.msra.mxu0 0.0
  %427 = vmatprep.subr.mxu0 0.0
  %428 = vmatpush1.msra.mxu0 0.0
  %429 = vmatprep.subr.mxu0 0.0
  %430 = vmatpush1.msra.mxu0 0.0
  %431 = vmatprep.mubr.f32.mxu0 0.0
  %432 = vmatmul.mubr.f32.gmra.mrb[0].mxu0 %v82
  %v433 = vpop.f32.mrb[0].mxu0
  %v434 = vadd.f32 0.0, %v433
  %v435 = vpop.f32.mrb[0].mxu0
  %v436 = vadd.f32 0.0, %v435
  %437 = vmatprep.mubr.f32.mxu0 0.0
  %438 = vmatmul.mubr.f32.gmra.mrb[0].mxu0 %v85
  %v439 = vpop.f32.mrb[0].mxu0
  %v440 = vadd.f32 0.0, %v439
  %v441 = vpop.f32.mrb[0].mxu0
  %v442 = vadd.f32 0.0, %v441
  %443 = vdwg.mxu0
  %444 = vmatprep.subr.mxu0 %v25
  %445 = vmatpush1.msra.mxu0 %v24
  %446 = vmatprep.subr.mxu0 %v41
  %447 = vmatpush1.msra.mxu0 %v40
  %448 = vmatprep.subr.mxu0 %v57
  %449 = vmatpush1.msra.mxu0 %v56
  %450 = vmatprep.subr.mxu0 %v116
  %451 = vmatpush1.msra.mxu0 %v113
  %452 = vmatprep.subr.mxu0 0.0
  %453 = vmatpush1.msra.mxu0 0.0
  %454 = vmatprep.subr.mxu0 0.0
  %455 = vmatpush1.msra.mxu0 0.0
  %456 = vmatprep.subr.mxu0 0.0
  %457 = vmatpush1.msra.mxu0 0.0
  %458 = vmatprep.subr.mxu0 0.0
  %459 = vmatpush1.msra.mxu0 0.0
  %460 = vmatprep.subr.mxu0 0.0
  %461 = vmatpush1.msra.mxu0 0.0
  %462 = vmatprep.subr.mxu0 0.0
  %463 = vmatpush1.msra.mxu0 0.0
  %464 = vmatprep.subr.mxu0 0.0
  %465 = vmatpush1.msra.mxu0 0.0
  %466 = vmatprep.subr.mxu0 0.0
  %467 = vmatpush1.msra.mxu0 0.0
  %468 = vmatprep.subr.mxu0 0.0
  %469 = vmatpush1.msra.mxu0 0.0
  %470 = vmatprep.subr.mxu0 0.0
  %471 = vmatpush1.msra.mxu0 0.0
  %472 = vmatprep.subr.mxu0 0.0
  %473 = vmatpush1.msra.mxu0 0.0
  %474 = vmatprep.subr.mxu0 0.0
  %475 = vmatpush1.msra.mxu0 0.0
  %476 = vmatprep.subr.mxu0 0.0
  %477 = vmatpush1.msra.mxu0 0.0
  %478 = vmatprep.subr.mxu0 0.0
  %479 = vmatpush1.msra.mxu0 0.0
  %480 = vmatprep.subr.mxu0 0.0
  %481 = vmatpush1.msra.mxu0 0.0
  %482 = vmatprep.subr.mxu0 0.0
  %483 = vmatpush1.msra.mxu0 0.0
  %484 = vmatprep.subr.mxu0 0.0
  %485 = vmatpush1.msra.mxu0 0.0
  %486 = vmatprep.subr.mxu0 0.0
  %487 = vmatpush1.msra.mxu0 0.0
  %488 = vmatprep.subr.mxu0 0.0
  %489 = vmatpush1.msra.mxu0 0.0
  %490 = vmatprep.subr.mxu0 0.0
  %491 = vmatpush1.msra.mxu0 0.0
  %492 = vmatprep.subr.mxu0 0.0
  %493 = vmatpush1.msra.mxu0 0.0
  %494 = vmatprep.subr.mxu0 0.0
  %495 = vmatpush1.msra.mxu0 0.0
  %496 = vmatprep.subr.mxu0 0.0
  %497 = vmatpush1.msra.mxu0 0.0
  %498 = vmatprep.subr.mxu0 0.0
  %499 = vmatpush1.msra.mxu0 0.0
  %500 = vmatprep.subr.mxu0 0.0
  %501 = vmatpush1.msra.mxu0 0.0
  %502 = vmatprep.subr.mxu0 0.0
  %503 = vmatpush1.msra.mxu0 0.0
  %504 = vmatprep.subr.mxu0 0.0
  %505 = vmatpush1.msra.mxu0 0.0
  %506 = vmatprep.subr.mxu0 0.0
  %507 = vmatpush1.msra.mxu0 0.0
  %508 = vmatprep.mubr.f32.mxu0 0.0
  %509 = vmatmul.mubr.f32.gmra.mrb[0].mxu0 %v82
  %v510 = vpop.f32.mrb[0].mxu0
  %v511 = vadd.f32 0.0, %v510
  %v512 = vpop.f32.mrb[0].mxu0
  %v513 = vadd.f32 0.0, %v512
  %514 = vmatprep.mubr.f32.mxu0 0.0
  %515 = vmatmul.mubr.f32.gmra.mrb[0].mxu0 %v85
  %v516 = vpop.f32.mrb[0].mxu0
  %v517 = vadd.f32 0.0, %v516
  %v518 = vpop.f32.mrb[0].mxu0
  %v519 = vadd.f32 0.0, %v518
  %520 = vdwg.mxu0
  %521 = vmatprep.subr.mxu0 %v27
  %522 = vmatpush1.msra.mxu0 %v26
  %523 = vmatprep.subr.mxu0 %v43
  %524 = vmatpush1.msra.mxu0 %v42
  %525 = vmatprep.subr.mxu0 %v59
  %526 = vmatpush1.msra.mxu0 %v58
  %527 = vmatprep.subr.mxu0 %v122
  %528 = vmatpush1.msra.mxu0 %v119
  %529 = vmatprep.subr.mxu0 0.0
  %530 = vmatpush1.msra.mxu0 0.0
  %531 = vmatprep.subr.mxu0 0.0
  %532 = vmatpush1.msra.mxu0 0.0
  %533 = vmatprep.subr.mxu0 0.0
  %534 = vmatpush1.msra.mxu0 0.0
  %535 = vmatprep.subr.mxu0 0.0
  %536 = vmatpush1.msra.mxu0 0.0
  %537 = vmatprep.subr.mxu0 0.0
  %538 = vmatpush1.msra.mxu0 0.0
  %539 = vmatprep.subr.mxu0 0.0
  %540 = vmatpush1.msra.mxu0 0.0
  %541 = vmatprep.subr.mxu0 0.0
  %542 = vmatpush1.msra.mxu0 0.0
  %543 = vmatprep.subr.mxu0 0.0
  %544 = vmatpush1.msra.mxu0 0.0
  %545 = vmatprep.subr.mxu0 0.0
  %546 = vmatpush1.msra.mxu0 0.0
  %547 = vmatprep.subr.mxu0 0.0
  %548 = vmatpush1.msra.mxu0 0.0
  %549 = vmatprep.subr.mxu0 0.0
  %550 = vmatpush1.msra.mxu0 0.0
  %551 = vmatprep.subr.mxu0 0.0
  %552 = vmatpush1.msra.mxu0 0.0
  %553 = vmatprep.subr.mxu0 0.0
  %554 = vmatpush1.msra.mxu0 0.0
  %555 = vmatprep.subr.mxu0 0.0
  %556 = vmatpush1.msra.mxu0 0.0
  %557 = vmatprep.subr.mxu0 0.0
  %558 = vmatpush1.msra.mxu0 0.0
  %559 = vmatprep.subr.mxu0 0.0
  %560 = vmatpush1.msra.mxu0 0.0
  %561 = vmatprep.subr.mxu0 0.0
  %562 = vmatpush1.msra.mxu0 0.0
  %563 = vmatprep.subr.mxu0 0.0
  %564 = vmatpush1.msra.mxu0 0.0
  %565 = vmatprep.subr.mxu0 0.0
  %566 = vmatpush1.msra.mxu0 0.0
  %567 = vmatprep.subr.mxu0 0.0
  %568 = vmatpush1.msra.mxu0 0.0
  %569 = vmatprep.subr.mxu0 0.0
  %570 = vmatpush1.msra.mxu0 0.0
  %571 = vmatprep.subr.mxu0 0.0
  %572 = vmatpush1.msra.mxu0 0.0
  %573 = vmatprep.subr.mxu0 0.0
  %574 = vmatpush1.msra.mxu0 0.0
  %575 = vmatprep.subr.mxu0 0.0
  %576 = vmatpush1.msra.mxu0 0.0
  %577 = vmatprep.subr.mxu0 0.0
  %578 = vmatpush1.msra.mxu0 0.0
  %579 = vmatprep.subr.mxu0 0.0
  %580 = vmatpush1.msra.mxu0 0.0
  %581 = vmatprep.subr.mxu0 0.0
  %582 = vmatpush1.msra.mxu0 0.0
  %583 = vmatprep.subr.mxu0 0.0
  %584 = vmatpush1.msra.mxu0 0.0
  %585 = vmatprep.mubr.f32.mxu0 0.0
  %586 = vmatmul.mubr.f32.gmra.mrb[0].mxu0 %v82
  %v587 = vpop.f32.mrb[0].mxu0
  %v588 = vadd.f32 0.0, %v587
  %v589 = vpop.f32.mrb[0].mxu0
  %v590 = vadd.f32 0.0, %v589
  %591 = vmatprep.mubr.f32.mxu0 0.0
  %592 = vmatmul.mubr.f32.gmra.mrb[0].mxu0 %v85
  %v593 = vpop.f32.mrb[0].mxu0
  %v594 = vadd.f32 0.0, %v593
  %v595 = vpop.f32.mrb[0].mxu0
  %v596 = vadd.f32 0.0, %v595
  %597 = vdwg.mxu0
  %598 = vmatprep.subr.mxu0 %v29
  %599 = vmatpush1.msra.mxu0 %v28
  %600 = vmatprep.subr.mxu0 %v45
  %601 = vmatpush1.msra.mxu0 %v44
  %602 = vmatprep.subr.mxu0 %v61
  %603 = vmatpush1.msra.mxu0 %v60
  %604 = vmatprep.subr.mxu0 %v128
  %605 = vmatpush1.msra.mxu0 %v125
  %606 = vmatprep.subr.mxu0 0.0
  %607 = vmatpush1.msra.mxu0 0.0
  %608 = vmatprep.subr.mxu0 0.0
  %609 = vmatpush1.msra.mxu0 0.0
  %610 = vmatprep.subr.mxu0 0.0
  %611 = vmatpush1.msra.mxu0 0.0
  %612 = vmatprep.subr.mxu0 0.0
  %613 = vmatpush1.msra.mxu0 0.0
  %614 = vmatprep.subr.mxu0 0.0
  %615 = vmatpush1.msra.mxu0 0.0
  %616 = vmatprep.subr.mxu0 0.0
  %617 = vmatpush1.msra.mxu0 0.0
  %618 = vmatprep.subr.mxu0 0.0
  %619 = vmatpush1.msra.mxu0 0.0
  %620 = vmatprep.subr.mxu0 0.0
  %621 = vmatpush1.msra.mxu0 0.0
  %622 = vmatprep.subr.mxu0 0.0
  %623 = vmatpush1.msra.mxu0 0.0
  %624 = vmatprep.subr.mxu0 0.0
  %625 = vmatpush1.msra.mxu0 0.0
  %626 = vmatprep.subr.mxu0 0.0
  %627 = vmatpush1.msra.mxu0 0.0
  %628 = vmatprep.subr.mxu0 0.0
  %629 = vmatpush1.msra.mxu0 0.0
  %630 = vmatprep.subr.mxu0 0.0
  %631 = vmatpush1.msra.mxu0 0.0
  %632 = vmatprep.subr.mxu0 0.0
  %633 = vmatpush1.msra.mxu0 0.0
  %634 = vmatprep.subr.mxu0 0.0
  %635 = vmatpush1.msra.mxu0 0.0
  %636 = vmatprep.subr.mxu0 0.0
  %637 = vmatpush1.msra.mxu0 0.0
  %638 = vmatprep.subr.mxu0 0.0
  %639 = vmatpush1.msra.mxu0 0.0
  %640 = vmatprep.subr.mxu0 0.0
  %641 = vmatpush1.msra.mxu0 0.0
  %642 = vmatprep.subr.mxu0 0.0
  %643 = vmatpush1.msra.mxu0 0.0
  %644 = vmatprep.subr.mxu0 0.0
  %645 = vmatpush1.msra.mxu0 0.0
  %646 = vmatprep.subr.mxu0 0.0
  %647 = vmatpush1.msra.mxu0 0.0
  %648 = vmatprep.subr.mxu0 0.0
  %649 = vmatpush1.msra.mxu0 0.0
  %650 = vmatprep.subr.mxu0 0.0
  %651 = vmatpush1.msra.mxu0 0.0
  %652 = vmatprep.subr.mxu0 0.0
  %653 = vmatpush1.msra.mxu0 0.0
  %654 = vmatprep.subr.mxu0 0.0
  %655 = vmatpush1.msra.mxu0 0.0
  %656 = vmatprep.subr.mxu0 0.0
  %657 = vmatpush1.msra.mxu0 0.0
  %658 = vmatprep.subr.mxu0 0.0
  %659 = vmatpush1.msra.mxu0 0.0
  %660 = vmatprep.subr.mxu0 0.0
  %661 = vmatpush1.msra.mxu0 0.0
  %662 = vmatprep.mubr.f32.mxu0 0.0
  %663 = vmatmul.mubr.f32.gmra.mrb[0].mxu0 %v82
  %v664 = vpop.f32.mrb[0].mxu0
  %v665 = vadd.f32 0.0, %v664
  %v666 = vpop.f32.mrb[0].mxu0
  %v667 = vadd.f32 0.0, %v666
  %668 = vmatprep.mubr.f32.mxu0 0.0
  %669 = vmatmul.mubr.f32.gmra.mrb[0].mxu0 %v85
  %v670 = vpop.f32.mrb[0].mxu0
  %v671 = vadd.f32 0.0, %v670
  %v672 = vpop.f32.mrb[0].mxu0
  %v673 = vadd.f32 0.0, %v672
  %674 = vdwg.mxu0
  %675 = vmatprep.subr.mxu0 %v31
  %676 = vmatpush1.msra.mxu0 %v30
  %677 = vmatprep.subr.mxu0 %v47
  %678 = vmatpush1.msra.mxu0 %v46
  %679 = vmatprep.subr.mxu0 %v63
  %680 = vmatpush1.msra.mxu0 %v62
  %681 = vmatprep.subr.mxu0 %v134
  %682 = vmatpush1.msra.mxu0 %v131
  %683 = vmatprep.subr.mxu0 0.0
  %684 = vmatpush1.msra.mxu0 0.0
  %685 = vmatprep.subr.mxu0 0.0
  %686 = vmatpush1.msra.mxu0 0.0
  %687 = vmatprep.subr.mxu0 0.0
  %688 = vmatpush1.msra.mxu0 0.0
  %689 = vmatprep.subr.mxu0 0.0
  %690 = vmatpush1.msra.mxu0 0.0
  %691 = vmatprep.subr.mxu0 0.0
  %692 = vmatpush1.msra.mxu0 0.0
  %693 = vmatprep.subr.mxu0 0.0
  %694 = vmatpush1.msra.mxu0 0.0
  %695 = vmatprep.subr.mxu0 0.0
  %696 = vmatpush1.msra.mxu0 0.0
  %697 = vmatprep.subr.mxu0 0.0
  %698 = vmatpush1.msra.mxu0 0.0
  %699 = vmatprep.subr.mxu0 0.0
  %700 = vmatpush1.msra.mxu0 0.0
  %701 = vmatprep.subr.mxu0 0.0
  %702 = vmatpush1.msra.mxu0 0.0
  %703 = vmatprep.subr.mxu0 0.0
  %704 = vmatpush1.msra.mxu0 0.0
  %705 = vmatprep.subr.mxu0 0.0
  %706 = vmatpush1.msra.mxu0 0.0
  %707 = vmatprep.subr.mxu0 0.0
  %708 = vmatpush1.msra.mxu0 0.0
  %709 = vmatprep.subr.mxu0 0.0
  %710 = vmatpush1.msra.mxu0 0.0
  %711 = vmatprep.subr.mxu0 0.0
  %712 = vmatpush1.msra.mxu0 0.0
  %713 = vmatprep.subr.mxu0 0.0
  %714 = vmatpush1.msra.mxu0 0.0
  %715 = vmatprep.subr.mxu0 0.0
  %716 = vmatpush1.msra.mxu0 0.0
  %717 = vmatprep.subr.mxu0 0.0
  %718 = vmatpush1.msra.mxu0 0.0
  %719 = vmatprep.subr.mxu0 0.0
  %720 = vmatpush1.msra.mxu0 0.0
  %721 = vmatprep.subr.mxu0 0.0
  %722 = vmatpush1.msra.mxu0 0.0
  %723 = vmatprep.subr.mxu0 0.0
  %724 = vmatpush1.msra.mxu0 0.0
  %725 = vmatprep.subr.mxu0 0.0
  %726 = vmatpush1.msra.mxu0 0.0
  %727 = vmatprep.subr.mxu0 0.0
  %728 = vmatpush1.msra.mxu0 0.0
  %729 = vmatprep.subr.mxu0 0.0
  %730 = vmatpush1.msra.mxu0 0.0
  %731 = vmatprep.subr.mxu0 0.0
  %732 = vmatpush1.msra.mxu0 0.0
  %733 = vmatprep.subr.mxu0 0.0
  %734 = vmatpush1.msra.mxu0 0.0
  %735 = vmatprep.subr.mxu0 0.0
  %736 = vmatpush1.msra.mxu0 0.0
  %737 = vmatprep.subr.mxu0 0.0
  %738 = vmatpush1.msra.mxu0 0.0
  %739 = vmatprep.mubr.f32.mxu0 0.0
  %740 = vmatmul.mubr.f32.gmra.mrb[0].mxu0 %v82
  %v741 = vpop.f32.mrb[0].mxu0
  %v742 = vadd.f32 0.0, %v741
  %v743 = vpop.f32.mrb[0].mxu0
  %v744 = vadd.f32 0.0, %v743
  %745 = vmatprep.mubr.f32.mxu0 0.0
  %746 = vmatmul.mubr.f32.gmra.mrb[0].mxu0 %v85
  %v747 = vpop.f32.mrb[0].mxu0
  %v748 = vadd.f32 0.0, %v747
  %v749 = vpop.f32.mrb[0].mxu0
  %v750 = vadd.f32 0.0, %v749
  %751 = vdwg.mxu0
  %v752 = vmax.f32 %v203, %v357
  %v753 = vmax.f32 %v205, %v359
  %v754 = vmax.f32 %v280, %v434
  %v755 = vmax.f32 %v282, %v436
  %v756 = vmax.f32 %v209, %v363
  %v757 = vmax.f32 %v211, %v365
  %v758 = vmax.f32 %v286, %v440
  %v759 = vmax.f32 %v288, %v442
  %v760 = vmax.f32 %v511, %v665
  %v761 = vmax.f32 %v513, %v667
  %v762 = vmax.f32 %v588, %v742
  %v763 = vmax.f32 %v590, %v744
  %v764 = vmax.f32 %v517, %v671
  %v765 = vmax.f32 %v519, %v673
  %v766 = vmax.f32 %v594, %v748
  %v767 = vmax.f32 %v596, %v750
  %v768 = vmax.f32 %v752, %v760
  %v769 = vmax.f32 %v753, %v761
  %v770 = vmax.f32 %v754, %v762
  %v771 = vmax.f32 %v755, %v763
  %v772 = vmax.f32 %v756, %v764
  %v773 = vmax.f32 %v757, %v765
  %v774 = vmax.f32 %v758, %v766
  %v775 = vmax.f32 %v759, %v767
  %v776 = vld [vmem:[%s2] sm:$0xff]
  %v777 = vld [vmem:[%s2 + $0x8] sm:$0x3]
  %779 = vset.pattern.permute.xlu0 0
  %780 = vperm.xlu0 %779, %v776
  %v781 = vpop.permute.xlu0 %780
  %784 = vset.pattern.permute.xlu0 0
  %785 = vperm.xlu0 %784, %v777
  %v786 = vpop.permute.xlu0 %785
  %v788 = vadd.f32 %v768, %v781
  %v789 = vadd.f32 %v769, %v781
  %v790 = vadd.f32 %v770, %v781
  %v791 = vadd.f32 %v771, %v781
  %v792 = vadd.f32 %v772, %v786
  %v793 = vadd.f32 %v773, %v786
  %v794 = vadd.f32 %v774, %v786
  %v795 = vadd.f32 %v775, %v786
  %v796 = vmax.f32 %v788, 0.0
  %v797 = vmax.f32 %v789, 0.0
  %v798 = vmax.f32 %v790, 0.0
  %v799 = vmax.f32 %v791, 0.0
  %v800 = vmax.f32 %v792, 0.0
  %v801 = vmax.f32 %v793, 0.0
  %v802 = vmax.f32 %v794, 0.0
  %v803 = vmax.f32 %v795, 0.0
  %804 = vst [vmem:[%s3] sm:$0xff] %v796
  %805 = vst [vmem:[%s3 + $0x8] sm:$0xff] %v797
  %806 = vst [vmem:[%s3 + $0x10] sm:$0xff] %v798
  %807 = vst [vmem:[%s3 + $0x18] sm:$0xff] %v799
  %808 = vst [vmem:[%s3 + $0x20] sm:$0x3] %v800
  %809 = vst [vmem:[%s3 + $0x28] sm:$0x3] %v801
  %810 = vst [vmem:[%s3 + $0x30] sm:$0x3] %v802
  %811 = vst [vmem:[%s3 + $0x38] sm:$0x3] %v803
  // Predicated region
  $region14: #{relu_module_forward.2} parent=0 // pred_check
    _
  $region15: #{relu_module_forward.2} parent=0 // pred_check_branch
    %813 = sbr.rel (0) target = $region17
  $region16: #{relu_module_forward.2} parent=0 // pred_region
    _
  $region17: #{relu_module_forward.2} parent=0 // pred_fallthru
    _
  // Predicated region
  $region18: #{relu_module_forward.2} parent=0 // pred_check
    _
  $region19: #{relu_module_forward.2} parent=0 // pred_check_branch
    %815 = sbr.rel (0) target = $region21
  $region20: #{relu_module_forward.2} parent=0 // pred_region
    _
  $region21: #{relu_module_forward.2} parent=0 // pred_fallthru
    _

// kernel: relu_module_forward.3
$region0: #{relu_module_forward.3}
  #allocation0 [shape = 'u32[]', space=smem, size = 0x4, offset = 0x4, fixed_abs, tag = 'smem constant byte address 0x4 - core index']
  #allocation1 [shape = 'u32[144,128]{1,0:T(1,128)}', space=vmem, size = 0x12000, scoped, tag = 'internal scratch']
  %s0 = inlined_call_operand.vmem [shape: f32[250,512], index: 0, kind: input, shape index: {}]
  %s1 = inlined_call_operand.vmem [shape: f32[20,250], index: 1, kind: input, shape index: {}]
  %s2 = inlined_call_operand.vmem [shape: f32[20,1], index: 2, kind: input, shape index: {}]
  %s3 = inlined_call_operand.vmem [shape: f32[20,128], index: 3, kind: output, shape index: {}]
  %s4 = sld [smem:[#allocation0]]
  $region22: #{relu_module_forward.3} parent=0
    _
  %s6 = ssub.s32 1, %s4
  %s7 = scalar_select 0, %s6, %s4
  // Predicated region
  $region2: #{relu_module_forward.3} parent=0 // pred_check
    _
  $region3: #{relu_module_forward.3} parent=0 // pred_check_branch
    %9 = sbr.rel (0) target = $region5
  $region4: #{relu_module_forward.3} parent=0 // pred_region
    _
  $region5: #{relu_module_forward.3} parent=0 // pred_fallthru
    _
  // Predicated region
  $region6: #{relu_module_forward.3} parent=0 // pred_check
    _
  $region7: #{relu_module_forward.3} parent=0 // pred_check_branch
    %11 = sbr.rel (0) target = $region9
  $region8: #{relu_module_forward.3} parent=0 // pred_region
    _
  $region9: #{relu_module_forward.3} parent=0 // pred_fallthru
    _
  // Predicated region
  $region10: #{relu_module_forward.3} parent=0 // pred_check
    _
  $region11: #{relu_module_forward.3} parent=0 // pred_check_branch
    %13 = sbr.rel (0) target = $region13
  $region12: #{relu_module_forward.3} parent=0 // pred_region
    _
  $region13: #{relu_module_forward.3} parent=0 // pred_fallthru
    _
  %v14 = vld [vmem:[%s1] sm:$0xff]
  %v15 = vld [vmem:[%s1 + $0x8] sm:$0xff]
  %v16 = vld [vmem:[%s1 + $0x10] sm:$0xff]
  %v17 = vld [vmem:[%s1 + $0x18] sm:$0xff]
  %v18 = vld [vmem:[%s1 + $0x20] sm:$0xf]
  %v19 = vld [vmem:[%s1 + $0x28] sm:$0xf]
  %v20 = vld [vmem:[%s0] sm:$0xff]
  %v21 = vld [vmem:[%s0 + $0x8] sm:$0xff]
  %v22 = vld [vmem:[%s0 + $0x10] sm:$0xff]
  %v23 = vld [vmem:[%s0 + $0x18] sm:$0xff]
  %v24 = vld [vmem:[%s0 + $0x20] sm:$0xff]
  %v25 = vld [vmem:[%s0 + $0x28] sm:$0xff]
  %v26 = vld [vmem:[%s0 + $0x30] sm:$0xff]
  %v27 = vld [vmem:[%s0 + $0x38] sm:$0xff]
  %v28 = vld [vmem:[%s0 + $0x40] sm:$0xff]
  %v29 = vld [vmem:[%s0 + $0x48] sm:$0xff]
  %v30 = vld [vmem:[%s0 + $0x50] sm:$0xff]
  %v31 = vld [vmem:[%s0 + $0x58] sm:$0xff]
  %v32 = vld [vmem:[%s0 + $0x60] sm:$0xff]
  %v33 = vld [vmem:[%s0 + $0x68] sm:$0xff]
  %v34 = vld [vmem:[%s0 + $0x70] sm:$0xff]
  %v35 = vld [vmem:[%s0 + $0x78] sm:$0xff]
  %v36 = vld [vmem:[%s0 + $0x80] sm:$0xff]
  %v37 = vld [vmem:[%s0 + $0x88] sm:$0xff]
  %v38 = vld [vmem:[%s0 + $0x90] sm:$0xff]
  %v39 = vld [vmem:[%s0 + $0x98] sm:$0xff]
  %v40 = vld [vmem:[%s0 + $0xa0] sm:$0xff]
  %v41 = vld [vmem:[%s0 + $0xa8] sm:$0xff]
  %v42 = vld [vmem:[%s0 + $0xb0] sm:$0xff]
  %v43 = vld [vmem:[%s0 + $0xb8] sm:$0xff]
  %v44 = vld [vmem:[%s0 + $0xc0] sm:$0xff]
  %v45 = vld [vmem:[%s0 + $0xc8] sm:$0xff]
  %v46 = vld [vmem:[%s0 + $0xd0] sm:$0xff]
  %v47 = vld [vmem:[%s0 + $0xd8] sm:$0xff]
  %v48 = vld [vmem:[%s0 + $0xe0] sm:$0xff]
  %v49 = vld [vmem:[%s0 + $0xe8] sm:$0xff]
  %v50 = vld [vmem:[%s0 + $0xf0] sm:$0xff]
  %v51 = vld [vmem:[%s0 + $0xf8] sm:$0xff]
  %v52 = vld [vmem:[%s0 + $0x100] sm:$0xff]
  %v53 = vld [vmem:[%s0 + $0x108] sm:$0xff]
  %v54 = vld [vmem:[%s0 + $0x110] sm:$0xff]
  %v55 = vld [vmem:[%s0 + $0x118] sm:$0xff]
  %v56 = vld [vmem:[%s0 + $0x120] sm:$0xff]
  %v57 = vld [vmem:[%s0 + $0x128] sm:$0xff]
  %v58 = vld [vmem:[%s0 + $0x130] sm:$0xff]
  %v59 = vld [vmem:[%s0 + $0x138] sm:$0xff]
  %v60 = vld [vmem:[%s0 + $0x140] sm:$0xff]
  %v61 = vld [vmem:[%s0 + $0x148] sm:$0xff]
  %v62 = vld [vmem:[%s0 + $0x150] sm:$0xff]
  %v63 = vld [vmem:[%s0 + $0x158] sm:$0xff]
  %v64 = vld [vmem:[%s0 + $0x160] sm:$0xff]
  %v65 = vld [vmem:[%s0 + $0x168] sm:$0xff]
  %v66 = vld [vmem:[%s0 + $0x170] sm:$0xff]
  %v67 = vld [vmem:[%s0 + $0x178] sm:$0xff]
  %v68 = vld [vmem:[%s0 + $0x180] sm:$0xff]
  %v69 = vld [vmem:[%s0 + $0x188] sm:$0xff]
  %v70 = vld [vmem:[%s0 + $0x190] sm:$0xff]
  %v71 = vld [vmem:[%s0 + $0x198] sm:$0xff]
  %v72 = vld [vmem:[%s0 + $0x1a0] sm:$0xff]
  %v73 = vld [vmem:[%s0 + $0x1a8] sm:$0xff]
  %v74 = vld [vmem:[%s0 + $0x1b0] sm:$0xff]
  %v75 = vld [vmem:[%s0 + $0x1b8] sm:$0xff]
  %v76 = vld [vmem:[%s0 + $0x1c0] sm:$0xff]
  %v77 = vld [vmem:[%s0 + $0x1c8] sm:$0xff]
  %v78 = vld [vmem:[%s0 + $0x1d0] sm:$0xff]
  %v79 = vld [vmem:[%s0 + $0x1d8] sm:$0xff]
  %v80 = vld [vmem:[%s0 + $0x1e0] sm:$0xff]
  %v81 = vld [vmem:[%s0 + $0x1e8] sm:$0xff]
  %v82 = vld [vmem:[%s0 + $0x1f0] sm:$0xff]
  %v83 = vld [vmem:[%s0 + $0x1f8] sm:$0xff]
  %v84 = vld [vmem:[%s0 + $0x200] sm:$0xff]
  %v85 = vld [vmem:[%s0 + $0x208] sm:$0xff]
  %v86 = vld [vmem:[%s0 + $0x210] sm:$0xff]
  %v87 = vld [vmem:[%s0 + $0x218] sm:$0xff]
  %v88 = vld [vmem:[%s0 + $0x220] sm:$0xff]
  %v89 = vld [vmem:[%s0 + $0x228] sm:$0xff]
  %v90 = vld [vmem:[%s0 + $0x230] sm:$0xff]
  %v91 = vld [vmem:[%s0 + $0x238] sm:$0xff]
  %v92 = vld [vmem:[%s0 + $0x240] sm:$0xff]
  %v93 = vld [vmem:[%s0 + $0x248] sm:$0xff]
  %v94 = vld [vmem:[%s0 + $0x250] sm:$0xff]
  %v95 = vld [vmem:[%s0 + $0x258] sm:$0xff]
  %v96 = vld [vmem:[%s0 + $0x260] sm:$0xff]
  %v97 = vld [vmem:[%s0 + $0x268] sm:$0xff]
  %v98 = vld [vmem:[%s0 + $0x270] sm:$0xff]
  %v99 = vld [vmem:[%s0 + $0x278] sm:$0xff]
  %v100 = vld [vmem:[%s0 + $0x280] sm:$0xff]
  %v101 = vld [vmem:[%s0 + $0x288] sm:$0xff]
  %v102 = vld [vmem:[%s0 + $0x290] sm:$0xff]
  %v103 = vld [vmem:[%s0 + $0x298] sm:$0xff]
  %v104 = vld [vmem:[%s0 + $0x2a0] sm:$0xff]
  %v105 = vld [vmem:[%s0 + $0x2a8] sm:$0xff]
  %v106 = vld [vmem:[%s0 + $0x2b0] sm:$0xff]
  %v107 = vld [vmem:[%s0 + $0x2b8] sm:$0xff]
  %v108 = vld [vmem:[%s0 + $0x2c0] sm:$0xff]
  %v109 = vld [vmem:[%s0 + $0x2c8] sm:$0xff]
  %v110 = vld [vmem:[%s0 + $0x2d0] sm:$0xff]
  %v111 = vld [vmem:[%s0 + $0x2d8] sm:$0xff]
  %v112 = vld [vmem:[%s0 + $0x2e0] sm:$0xff]
  %v113 = vld [vmem:[%s0 + $0x2e8] sm:$0xff]
  %v114 = vld [vmem:[%s0 + $0x2f0] sm:$0xff]
  %v115 = vld [vmem:[%s0 + $0x2f8] sm:$0xff]
  %v116 = vld [vmem:[%s0 + $0x300] sm:$0xff]
  %v117 = vld [vmem:[%s0 + $0x308] sm:$0xff]
  %v118 = vld [vmem:[%s0 + $0x310] sm:$0xff]
  %v119 = vld [vmem:[%s0 + $0x318] sm:$0xff]
  %v120 = vld [vmem:[%s0 + $0x320] sm:$0xff]
  %v121 = vld [vmem:[%s0 + $0x328] sm:$0xff]
  %v122 = vld [vmem:[%s0 + $0x330] sm:$0xff]
  %v123 = vld [vmem:[%s0 + $0x338] sm:$0xff]
  %v124 = vld [vmem:[%s0 + $0x340] sm:$0xff]
  %v125 = vld [vmem:[%s0 + $0x348] sm:$0xff]
  %v126 = vld [vmem:[%s0 + $0x350] sm:$0xff]
  %v127 = vld [vmem:[%s0 + $0x358] sm:$0xff]
  %v128 = vld [vmem:[%s0 + $0x360] sm:$0xff]
  %v129 = vld [vmem:[%s0 + $0x368] sm:$0xff]
  %v130 = vld [vmem:[%s0 + $0x370] sm:$0xff]
  %v131 = vld [vmem:[%s0 + $0x378] sm:$0xff]
  %v132 = vld [vmem:[%s0 + $0x380] sm:$0xff]
  %v133 = vld [vmem:[%s0 + $0x388] sm:$0xff]
  %v134 = vld [vmem:[%s0 + $0x390] sm:$0xff]
  %v135 = vld [vmem:[%s0 + $0x398] sm:$0xff]
  %v136 = vld [vmem:[%s0 + $0x3a0] sm:$0xff]
  %v137 = vld [vmem:[%s0 + $0x3a8] sm:$0xff]
  %v138 = vld [vmem:[%s0 + $0x3b0] sm:$0xff]
  %v139 = vld [vmem:[%s0 + $0x3b8] sm:$0xff]
  %v140 = vld [vmem:[%s0 + $0x3c0] sm:$0xff]
  %v141 = vld [vmem:[%s0 + $0x3c8] sm:$0xff]
  %v142 = vld [vmem:[%s0 + $0x3d0] sm:$0xff]
  %v143 = vld [vmem:[%s0 + $0x3d8] sm:$0xff]
  %v144 = vld [vmem:[%s0 + $0x3e0] sm:$0x3]
  %v145 = vld [vmem:[%s0 + $0x3e8] sm:$0x3]
  %v146 = vld [vmem:[%s0 + $0x3f0] sm:$0x3]
  %v147 = vld [vmem:[%s0 + $0x3f8] sm:$0x3]
  %vm148 = vcmask 998400
  %v150 = vsel %vm148, %v15, 0
  %v153 = vsel %vm148, %v17, 0
  %v156 = vsel %vm148, %v19, 0
  %vm158 = vcmask 1041408
  %v160 = vsel %vm158, %v144, 0
  %v163 = vsel %vm158, %v145, 0
  %v166 = vsel %vm158, %v146, 0
  %v169 = vsel %vm158, %v147, 0
  %171 = vmatprep.subr.mxu0 %v21
  %172 = vmatpush1.msra.mxu0 %v20
  %173 = vmatprep.subr.mxu0 %v25
  %174 = vmatpush1.msra.mxu0 %v24
  %175 = vmatprep.subr.mxu0 %v29
  %176 = vmatpush1.msra.mxu0 %v28
  %177 = vmatprep.subr.mxu0 %v33
  %178 = vmatpush1.msra.mxu0 %v32
  %179 = vmatprep.subr.mxu0 %v37
  %180 = vmatpush1.msra.mxu0 %v36
  %181 = vmatprep.subr.mxu0 %v41
  %182 = vmatpush1.msra.mxu0 %v40
  %183 = vmatprep.subr.mxu0 %v45
  %184 = vmatpush1.msra.mxu0 %v44
  %185 = vmatprep.subr.mxu0 %v49
  %186 = vmatpush1.msra.mxu0 %v48
  %187 = vmatprep.subr.mxu0 %v53
  %188 = vmatpush1.msra.mxu0 %v52
  %189 = vmatprep.subr.mxu0 %v57
  %190 = vmatpush1.msra.mxu0 %v56
  %191 = vmatprep.subr.mxu0 %v61
  %192 = vmatpush1.msra.mxu0 %v60
  %193 = vmatprep.subr.mxu0 %v65
  %194 = vmatpush1.msra.mxu0 %v64
  %195 = vmatprep.subr.mxu0 %v69
  %196 = vmatpush1.msra.mxu0 %v68
  %197 = vmatprep.subr.mxu0 %v73
  %198 = vmatpush1.msra.mxu0 %v72
  %199 = vmatprep.subr.mxu0 %v77
  %200 = vmatpush1.msra.mxu0 %v76
  %201 = vmatprep.subr.mxu0 %v81
  %202 = vmatpush1.msra.mxu0 %v80
  %203 = vmatprep.subr.mxu0 %v85
  %204 = vmatpush1.msra.mxu0 %v84
  %205 = vmatprep.subr.mxu0 %v89
  %206 = vmatpush1.msra.mxu0 %v88
  %207 = vmatprep.subr.mxu0 %v93
  %208 = vmatpush1.msra.mxu0 %v92
  %209 = vmatprep.subr.mxu0 %v97
  %210 = vmatpush1.msra.mxu0 %v96
  %211 = vmatprep.subr.mxu0 %v101
  %212 = vmatpush1.msra.mxu0 %v100
  %213 = vmatprep.subr.mxu0 %v105
  %214 = vmatpush1.msra.mxu0 %v104
  %215 = vmatprep.subr.mxu0 %v109
  %216 = vmatpush1.msra.mxu0 %v108
  %217 = vmatprep.subr.mxu0 %v113
  %218 = vmatpush1.msra.mxu0 %v112
  %219 = vmatprep.subr.mxu0 %v117
  %220 = vmatpush1.msra.mxu0 %v116
  %221 = vmatprep.subr.mxu0 %v121
  %222 = vmatpush1.msra.mxu0 %v120
  %223 = vmatprep.subr.mxu0 %v125
  %224 = vmatpush1.msra.mxu0 %v124
  %225 = vmatprep.subr.mxu0 %v129
  %226 = vmatpush1.msra.mxu0 %v128
  %227 = vmatprep.subr.mxu0 %v133
  %228 = vmatpush1.msra.mxu0 %v132
  %229 = vmatprep.subr.mxu0 %v137
  %230 = vmatpush1.msra.mxu0 %v136
  %231 = vmatprep.subr.mxu0 %v141
  %232 = vmatpush1.msra.mxu0 %v140
  %233 = vmatprep.subr.mxu0 %v163
  %234 = vmatpush1.msra.mxu0 %v160
  %235 = vmatprep.mubr.f32.mxu0 %v150
  %236 = vmatmul.mubr.f32.gmra.mrb[0].mxu0 %v14
  %v237 = vpop.f32.mrb[0].mxu0
  %v238 = vadd.f32 0.0, %v237
  %v239 = vpop.f32.mrb[0].mxu0
  %v240 = vadd.f32 0.0, %v239
  %241 = vmatprep.mubr.f32.mxu0 %v153
  %242 = vmatmul.mubr.f32.gmra.mrb[0].mxu0 %v16
  %v243 = vpop.f32.mrb[0].mxu0
  %v244 = vadd.f32 0.0, %v243
  %v245 = vpop.f32.mrb[0].mxu0
  %v246 = vadd.f32 0.0, %v245
  %247 = vmatprep.mubr.f32.mxu0 %v156
  %248 = vmatmul.mubr.f32.gmra.mrb[0].mxu0 %v18
  %v249 = vpop.f32.mrb[0].mxu0
  %v250 = vadd.f32 0.0, %v249
  %v251 = vpop.f32.mrb[0].mxu0
  %v252 = vadd.f32 0.0, %v251
  %253 = vdwg.mxu0
  %254 = vmatprep.subr.mxu0 %v23
  %255 = vmatpush1.msra.mxu0 %v22
  %256 = vmatprep.subr.mxu0 %v27
  %257 = vmatpush1.msra.mxu0 %v26
  %258 = vmatprep.subr.mxu0 %v31
  %259 = vmatpush1.msra.mxu0 %v30
  %260 = vmatprep.subr.mxu0 %v35
  %261 = vmatpush1.msra.mxu0 %v34
  %262 = vmatprep.subr.mxu0 %v39
  %263 = vmatpush1.msra.mxu0 %v38
  %264 = vmatprep.subr.mxu0 %v43
  %265 = vmatpush1.msra.mxu0 %v42
  %266 = vmatprep.subr.mxu0 %v47
  %267 = vmatpush1.msra.mxu0 %v46
  %268 = vmatprep.subr.mxu0 %v51
  %269 = vmatpush1.msra.mxu0 %v50
  %270 = vmatprep.subr.mxu0 %v55
  %271 = vmatpush1.msra.mxu0 %v54
  %272 = vmatprep.subr.mxu0 %v59
  %273 = vmatpush1.msra.mxu0 %v58
  %274 = vmatprep.subr.mxu0 %v63
  %275 = vmatpush1.msra.mxu0 %v62
  %276 = vmatprep.subr.mxu0 %v67
  %277 = vmatpush1.msra.mxu0 %v66
  %278 = vmatprep.subr.mxu0 %v71
  %279 = vmatpush1.msra.mxu0 %v70
  %280 = vmatprep.subr.mxu0 %v75
  %281 = vmatpush1.msra.mxu0 %v74
  %282 = vmatprep.subr.mxu0 %v79
  %283 = vmatpush1.msra.mxu0 %v78
  %284 = vmatprep.subr.mxu0 %v83
  %285 = vmatpush1.msra.mxu0 %v82
  %286 = vmatprep.subr.mxu0 %v87
  %287 = vmatpush1.msra.mxu0 %v86
  %288 = vmatprep.subr.mxu0 %v91
  %289 = vmatpush1.msra.mxu0 %v90
  %290 = vmatprep.subr.mxu0 %v95
  %291 = vmatpush1.msra.mxu0 %v94
  %292 = vmatprep.subr.mxu0 %v99
  %293 = vmatpush1.msra.mxu0 %v98
  %294 = vmatprep.subr.mxu0 %v103
  %295 = vmatpush1.msra.mxu0 %v102
  %296 = vmatprep.subr.mxu0 %v107
  %297 = vmatpush1.msra.mxu0 %v106
  %298 = vmatprep.subr.mxu0 %v111
  %299 = vmatpush1.msra.mxu0 %v110
  %300 = vmatprep.subr.mxu0 %v115
  %301 = vmatpush1.msra.mxu0 %v114
  %302 = vmatprep.subr.mxu0 %v119
  %303 = vmatpush1.msra.mxu0 %v118
  %304 = vmatprep.subr.mxu0 %v123
  %305 = vmatpush1.msra.mxu0 %v122
  %306 = vmatprep.subr.mxu0 %v127
  %307 = vmatpush1.msra.mxu0 %v126
  %308 = vmatprep.subr.mxu0 %v131
  %309 = vmatpush1.msra.mxu0 %v130
  %310 = vmatprep.subr.mxu0 %v135
  %311 = vmatpush1.msra.mxu0 %v134
  %312 = vmatprep.subr.mxu0 %v139
  %313 = vmatpush1.msra.mxu0 %v138
  %314 = vmatprep.subr.mxu0 %v143
  %315 = vmatpush1.msra.mxu0 %v142
  %316 = vmatprep.subr.mxu0 %v169
  %317 = vmatpush1.msra.mxu0 %v166
  %318 = vmatprep.mubr.f32.mxu0 %v150
  %319 = vmatmul.mubr.f32.gmra.mrb[0].mxu0 %v14
  %v320 = vpop.f32.mrb[0].mxu0
  %v321 = vadd.f32 0.0, %v320
  %v322 = vpop.f32.mrb[0].mxu0
  %v323 = vadd.f32 0.0, %v322
  %324 = vmatprep.mubr.f32.mxu0 %v153
  %325 = vmatmul.mubr.f32.gmra.mrb[0].mxu0 %v16
  %v326 = vpop.f32.mrb[0].mxu0
  %v327 = vadd.f32 0.0, %v326
  %v328 = vpop.f32.mrb[0].mxu0
  %v329 = vadd.f32 0.0, %v328
  %330 = vmatprep.mubr.f32.mxu0 %v156
  %331 = vmatmul.mubr.f32.gmra.mrb[0].mxu0 %v18
  %v332 = vpop.f32.mrb[0].mxu0
  %v333 = vadd.f32 0.0, %v332
  %v334 = vpop.f32.mrb[0].mxu0
  %v335 = vadd.f32 0.0, %v334
  %336 = vdwg.mxu0
  %v337 = vmax.f32 %v238, %v240
  %v338 = vmax.f32 %v244, %v246
  %v339 = vmax.f32 %v250, %v252
  %v340 = vmax.f32 %v321, %v323
  %v341 = vmax.f32 %v327, %v329
  %v342 = vmax.f32 %v333, %v335
  %v343 = vmax.f32 %v337, %v340
  %v344 = vmax.f32 %v338, %v341
  %v345 = vmax.f32 %v339, %v342
  %v346 = vld [vmem:[%s2] sm:$0xff]
  %v347 = vld [vmem:[%s2 + $0x8] sm:$0xff]
  %v348 = vld [vmem:[%s2 + $0x10] sm:$0xf]
  %350 = vset.pattern.permute.xlu0 0
  %351 = vperm.xlu0 %350, %v346
  %v352 = vpop.permute.xlu0 %351
  %355 = vset.pattern.permute.xlu0 0
  %356 = vperm.xlu0 %355, %v347
  %v357 = vpop.permute.xlu0 %356
  %360 = vset.pattern.permute.xlu0 0
  %361 = vperm.xlu0 %360, %v348
  %v362 = vpop.permute.xlu0 %361
  %v364 = vadd.f32 %v343, %v352
  %v365 = vadd.f32 %v344, %v357
  %v366 = vadd.f32 %v345, %v362
  %v367 = vmax.f32 %v364, 0.0
  %v368 = vmax.f32 %v365, 0.0
  %v369 = vmax.f32 %v366, 0.0
  %370 = vst [vmem:[%s3] sm:$0xff] %v367
  %371 = vst [vmem:[%s3 + $0x8] sm:$0xff] %v368
  %372 = vst [vmem:[%s3 + $0x10] sm:$0xf] %v369
  // Predicated region
  $region14: #{relu_module_forward.3} parent=0 // pred_check
    _
  $region15: #{relu_module_forward.3} parent=0 // pred_check_branch
    %374 = sbr.rel (0) target = $region17
  $region16: #{relu_module_forward.3} parent=0 // pred_region
    _
  $region17: #{relu_module_forward.3} parent=0 // pred_fallthru
    _
  // Predicated region
  $region18: #{relu_module_forward.3} parent=0 // pred_check
    _
  $region19: #{relu_module_forward.3} parent=0 // pred_check_branch
    %376 = sbr.rel (0) target = $region21
  $region20: #{relu_module_forward.3} parent=0 // pred_region
    _
  $region21: #{relu_module_forward.3} parent=0 // pred_fallthru
    _

</llo_original>
